<compile_context>
chip_gen: v7x
topology: tpu7x:2x2x1
jax: 0.10.0
libtpu: 0.0.40
codegen_flags: <defaults>
</compile_context>

<pallas_src>
import functools

import jax
import jax.numpy as jnp
from jax.experimental import pallas as pl
from jax.experimental.pallas import tpu as pltpu


def actor_critic_kernel(x_ref, w1_ref, b1_ref, w2_ref, b2_ref,
                        probs_ref, value_ref, *, num_outputs):
    x = x_ref[...]

    # Fused first layer (actor || critic) -> ReLU.                  (TB, 2H)
    h = jnp.dot(x, w1_ref[...], preferred_element_type=jnp.float32) + b1_ref[...]
    h = jnp.maximum(h, 0.0)

    # Fused block-diagonal second layer:                            (TB, OUT_PAD)
    #   lanes [0:num_outputs] = actor logits, lane num_outputs = critic value.
    z = jnp.dot(h, w2_ref[...], preferred_element_type=jnp.float32) + b2_ref[...]

    lane = jax.lax.broadcasted_iota(jnp.int32, z.shape, 1)
    is_logit = lane < num_outputs

    # Softmax over the real logit lanes only (padded lanes masked to -1e30,
    # exp underflows to 0 in f32).  All element-wise work stays f32 (v5e's
    # VPU/EUP have no bf16 path).
    logits = jnp.where(is_logit, z, jnp.float32(-1e30))
    m = jnp.max(logits, axis=-1, keepdims=True)
    e = jnp.exp(logits - m)
    s = jnp.sum(e, axis=-1, keepdims=True)
    # Approx reciprocal rides the EUP slot; one Newton step restores full f32
    # accuracy so sum(probs) == 1 to rounding.
    inv = pl.reciprocal(s, approx=True)
    inv = inv * (2.0 - s * inv)
    probs = e * inv

    # Slim stores: only the useful lanes go back to HBM.
    probs_ref[...] = probs[:, :num_outputs]                            # (TB, A)
    value_ref[...] = jnp.sum(jnp.where(lane == num_outputs, z, 0.0),
                             axis=-1, keepdims=True)                   # (TB, 1)
    # TODO(synk): a spare lane could also carry m + log(s) (LSE) so that a
    # numerically stable Categorical.log_prob can be rebuilt in JAX.


def prepare_fused_params(params):
    """One-time fusion of actor/critic weights into the kernel layout.

    Call once per parameter update; every forward call reuses the result,
    so the per-call wrapper does no extra XLA ops on the weights.
    """
    num_inputs, hidden = params["w1a"].shape
    num_outputs = params["w2a"].shape[1]
    out_pad = 128 * pl.cdiv(num_outputs + 1, 128)   # lane-padded fused width

    w1 = jnp.concatenate([params["w1a"], params["w1c"]], axis=1)    # (in, 2H)
    b1 = jnp.concatenate([params["b1a"], params["b1c"]], axis=1)    # (1, 2H)
    w2 = jnp.zeros((2 * hidden, out_pad), jnp.float32)
    w2 = w2.at[:hidden, :num_outputs].set(params["w2a"])            # actor block
    w2 = w2.at[hidden:, num_outputs].set(params["w2c"][:, 0])       # critic column
    b2 = jnp.zeros((1, out_pad), jnp.float32)
    b2 = b2.at[:, :num_outputs].set(params["b2a"][0])
    b2 = b2.at[:, num_outputs].set(params["b2c"][0, 0])
    return dict(w1=w1, b1=b1, w2=w2, b2=b2,
                num_inputs=num_inputs, hidden=hidden,
                num_outputs=num_outputs, out_pad=out_pad)


def actor_critic_forward(x, fused, *, block_b=2048):
    """ActorCritic forward in a single gridded Pallas kernel.

    x: (B, num_inputs) float32
    fused: output of prepare_fused_params
    returns: (probs (B, num_outputs), value (B, 1))
    """
    B, num_inputs = x.shape
    assert num_inputs == fused["num_inputs"]
    hidden = fused["hidden"]
    num_outputs = fused["num_outputs"]
    out_pad = fused["out_pad"]

    # Batch tile: multiple of 8; at least 2 tiles once B >= 16 so the
    # "parallel" batch axis has work for both v7x TensorCores; capped at
    # block_b (default 2048 stays inside v5e's 16 MiB scoped VMEM and v7x's
    # 64 MiB physical VMEM with double-buffering + f32 temps).
    tb = max(8, min(block_b, 8 * pl.cdiv(B, 16)))
    b_pad = tb * pl.cdiv(B, tb)
    if b_pad != B:
        x = jnp.pad(x, ((0, b_pad - B), (0, 0)))

    kernel = functools.partial(actor_critic_kernel, num_outputs=num_outputs)

    probs, value = pl.pallas_call(
        kernel,
        out_shape=(jax.ShapeDtypeStruct((b_pad, num_outputs), jnp.float32),
                   jax.ShapeDtypeStruct((b_pad, 1), jnp.float32)),
        grid_spec=pltpu.PrefetchScalarGridSpec(
            num_scalar_prefetch=0,
            grid=(b_pad // tb,),
            in_specs=[
                pl.BlockSpec((tb, num_inputs), lambda i: (i, 0)),          # x tile
                pl.BlockSpec((num_inputs, 2 * hidden), lambda i: (0, 0)),  # W1 resident
                pl.BlockSpec((1, 2 * hidden), lambda i: (0, 0)),           # b1 resident
                pl.BlockSpec((2 * hidden, out_pad), lambda i: (0, 0)),     # W2 resident
                pl.BlockSpec((1, out_pad), lambda i: (0, 0)),              # b2 resident
            ],
            out_specs=(
                pl.BlockSpec((tb, num_outputs), lambda i: (i, 0)),         # probs tile
                pl.BlockSpec((tb, 1), lambda i: (i, 0)),                   # value tile
            ),
        ),
        compiler_params=pltpu.CompilerParams(
            dimension_semantics=("parallel",),   # batch tiles shard across TCs on v7x
        ),
    )(x, fused["w1"], fused["b1"], fused["w2"], fused["b2"])

    return probs[:B], value[:B]


def init_params(key, num_inputs, num_outputs, hidden_size):
    """Deterministic init mimicking PyTorch nn.Linear default (uniform +-1/sqrt(fan_in))."""
    ks = jax.random.split(key, 8)

    def linear(kw, kb, fan_in, fan_out):
        bound = 1.0 / jnp.sqrt(float(fan_in))
        w = jax.random.uniform(kw, (fan_in, fan_out), jnp.float32, -bound, bound)
        b = jax.random.uniform(kb, (1, fan_out), jnp.float32, -bound, bound)
        return w, b

    w1c, b1c = linear(ks[0], ks[1], num_inputs, hidden_size)
    w2c, b2c = linear(ks[2], ks[3], hidden_size, 1)
    w1a, b1a = linear(ks[4], ks[5], num_inputs, hidden_size)
    w2a, b2a = linear(ks[6], ks[7], hidden_size, num_outputs)
    return dict(w1c=w1c, b1c=b1c, w2c=w2c, b2c=b2c,
                w1a=w1a, b1a=b1a, w2a=w2a, b2a=b2a)


def _reference(x, params):
    hc = jnp.maximum(x @ params["w1c"] + params["b1c"], 0.0)
    value_ref = hc @ params["w2c"] + params["b2c"]
    ha = jnp.maximum(x @ params["w1a"] + params["b1a"], 0.0)
    probs_ref = jax.nn.softmax(ha @ params["w2a"] + params["b2a"], axis=1)
    return probs_ref, value_ref


if __name__ == "__main__":
    num_inputs, num_outputs, hidden_size = 16, 8, 32

    key = jax.random.PRNGKey(0)
    k_x, k_p, k_x2 = jax.random.split(key, 3)
    params = init_params(k_p, num_inputs, num_outputs, hidden_size)

    # One-time weight fusion (per parameter update, not per forward).
    fused = prepare_fused_params(params)
    jax.block_until_ready(fused)

    # --- small shape (single grid step) ---
    B = 8
    x = jax.random.normal(k_x, (B, num_inputs), dtype=jnp.float32)
    probs, value = actor_critic_forward(x, fused)
    jax.block_until_ready((probs, value))

    probs_ref, value_ref = _reference(x, params)
    assert probs.shape == (B, num_outputs) and value.shape == (B, 1)
    assert jnp.allclose(probs, probs_ref, atol=1e-5)
    assert jnp.allclose(value, value_ref, atol=1e-5)
    assert jnp.allclose(jnp.sum(probs, axis=1), 1.0, atol=1e-5)

    # --- larger, non-multiple batch: exercises grid (>=2 tiles) + batch padding ---
    B2 = 200
    x2 = jax.random.normal(k_x2, (B2, num_inputs), dtype=jnp.float32)
    probs2, value2 = actor_critic_forward(x2, fused, block_b=64)  # 4 grid tiles
    jax.block_until_ready((probs2, value2))

    probs2_ref, value2_ref = _reference(x2, params)
    assert probs2.shape == (B2, num_outputs) and value2.shape == (B2, 1)
    assert jnp.allclose(probs2, probs2_ref, atol=1e-5)
    assert jnp.allclose(value2, value2_ref, atol=1e-5)
    assert jnp.allclose(jnp.sum(probs2, axis=1), 1.0, atol=1e-5)

    # --- default tiling path (tb chosen so B>=16 gives >=2 tiles for v7x) ---
    probs3, value3 = actor_critic_forward(x2, fused)
    jax.block_until_ready((probs3, value3))
    assert jnp.allclose(probs3, probs2_ref, atol=1e-5)
    assert jnp.allclose(value3, value2_ref, atol=1e-5)

    # TODO(synk): torch.distributions.Categorical has no Pallas equivalent;
    # the kernel returns dist.probs (sampling/log_prob can be done in JAX on top).
    print("KERNEL_OK")
</pallas_src>

<mosaic_0001>
module attributes {stable_mosaic.version = 11 : i64} {
  func.func @actor_critic_kernel(%arg0: i32, %arg1: memref<8x16xf32, #tpu.memory_space<vmem>>, %arg2: memref<16x64xf32, #tpu.memory_space<vmem>>, %arg3: memref<1x64xf32, #tpu.memory_space<vmem>>, %arg4: memref<64x128xf32, #tpu.memory_space<vmem>>, %arg5: memref<1x128xf32, #tpu.memory_space<vmem>>, %arg6: memref<8x8xf32, #tpu.memory_space<vmem>>, %arg7: memref<8x1xf32, #tpu.memory_space<vmem>>) attributes {dimension_semantics = [#tpu.dimension_semantics<parallel>], iteration_bounds = array<i64: 1>, scalar_prefetch = 0 : i64, scratch_operands = 0 : i64, tpu.core_type = #tpu.core_type<tc>, window_params = [{transform_indices = @transform_0, window_bounds = array<i64: 8, 16>}, {pipeline_mode = #tpu.pipeline_mode<synchronous>, transform_indices = @transform_1, window_bounds = array<i64: 16, 64>}, {pipeline_mode = #tpu.pipeline_mode<synchronous>, transform_indices = @transform_2, window_bounds = array<i64: 1, 64>}, {pipeline_mode = #tpu.pipeline_mode<synchronous>, transform_indices = @transform_3, window_bounds = array<i64: 64, 128>}, {pipeline_mode = #tpu.pipeline_mode<synchronous>, transform_indices = @transform_4, window_bounds = array<i64: 1, 128>}, {transform_indices = @transform_5, window_bounds = array<i64: 8, 8>}, {transform_indices = @transform_6, window_bounds = array<i64: 8, 1>}]} {
    %c0 = arith.constant 0 : index
    %c0_0 = arith.constant 0 : index
    %0 = vector.load %arg1[%c0, %c0_0] : memref<8x16xf32, #tpu.memory_space<vmem>>, vector<8x16xf32>
    %c0_1 = arith.constant 0 : index
    %c0_2 = arith.constant 0 : index
    %1 = vector.load %arg2[%c0_1, %c0_2] : memref<16x64xf32, #tpu.memory_space<vmem>>, vector<16x64xf32>
    %cst = arith.constant dense<0.000000e+00> : vector<8x64xf32>
    %2 = tpu.matmul %0, %1, %cst {dimension_numbers = #tpu.dot_dimension_numbers<[1], [0], [0], [1], [0, 0, 1, 1], [], []>} : vector<8x16xf32>, vector<16x64xf32>, vector<8x64xf32> -> vector<8x64xf32>
    %c0_3 = arith.constant 0 : index
    %c0_4 = arith.constant 0 : index
    %3 = vector.load %arg3[%c0_3, %c0_4] : memref<1x64xf32, #tpu.memory_space<vmem>>, vector<1x64xf32>
    %4 = vector.broadcast %3 : vector<1x64xf32> to vector<8x64xf32>
    %5 = arith.addf %2, %4 : vector<8x64xf32>
    %cst_5 = arith.constant 0.000000e+00 : f32
    %6 = vector.broadcast %cst_5 : f32 to vector<8x64xf32>
    %7 = arith.maximumf %5, %6 : vector<8x64xf32>
    %c0_6 = arith.constant 0 : index
    %c0_7 = arith.constant 0 : index
    %8 = vector.load %arg4[%c0_6, %c0_7] : memref<64x128xf32, #tpu.memory_space<vmem>>, vector<64x128xf32>
    %cst_8 = arith.constant dense<0.000000e+00> : vector<8x128xf32>
    %9 = tpu.matmul %7, %8, %cst_8 {dimension_numbers = #tpu.dot_dimension_numbers<[1], [0], [0], [1], [0, 0, 1, 1], [], []>} : vector<8x64xf32>, vector<64x128xf32>, vector<8x128xf32> -> vector<8x128xf32>
    %c0_9 = arith.constant 0 : index
    %c0_10 = arith.constant 0 : index
    %10 = vector.load %arg5[%c0_9, %c0_10] : memref<1x128xf32, #tpu.memory_space<vmem>>, vector<1x128xf32>
    %11 = vector.broadcast %10 : vector<1x128xf32> to vector<8x128xf32>
    %12 = arith.addf %9, %11 : vector<8x128xf32>
    %13 = tpu.iota {dimensions = array<i32: 1>} : vector<8x128xi32>
    %c8_i32 = arith.constant 8 : i32
    %14 = vector.broadcast %c8_i32 : i32 to vector<8x128xi32>
    %15 = arith.cmpi slt, %13, %14 : vector<8x128xi32>
    %cst_11 = arith.constant -1.000000e+30 : f32
    %16 = vector.broadcast %cst_11 : f32 to vector<8x128xf32>
    %17 = arith.select %15, %12, %16 : vector<8x128xi1>, vector<8x128xf32>
    %cst_12 = arith.constant dense<0xFF800000> : vector<8xf32>
    %18 = vector.multi_reduction <maximumf>, %17, %cst_12 [1] : vector<8x128xf32> to vector<8xf32>
    %19 = vector.shape_cast %18 : vector<8xf32> to vector<8x1xf32>
    %20 = vector.broadcast %19 : vector<8x1xf32> to vector<8x128xf32>
    %21 = arith.subf %17, %20 : vector<8x128xf32>
    %22 = math.exp %21 : vector<8x128xf32>
    %cst_13 = arith.constant dense<0.000000e+00> : vector<8xf32>
    %23 = vector.multi_reduction <add>, %22, %cst_13 [1] : vector<8x128xf32> to vector<8xf32>
    %24 = vector.shape_cast %23 : vector<8xf32> to vector<8x1xf32>
    %25 = tpu.reciprocal %24 {approx = true} : vector<8x1xf32> -> vector<8x1xf32>
    %26 = arith.mulf %24, %25 : vector<8x1xf32>
    %cst_14 = arith.constant 2.000000e+00 : f32
    %27 = vector.broadcast %cst_14 : f32 to vector<8x1xf32>
    %28 = arith.subf %27, %26 : vector<8x1xf32>
    %29 = arith.mulf %25, %28 : vector<8x1xf32>
    %30 = vector.broadcast %29 : vector<8x1xf32> to vector<8x128xf32>
    %31 = arith.mulf %22, %30 : vector<8x128xf32>
    %32 = vector.extract_strided_slice %31 {offsets = [0, 0], sizes = [8, 8], strides = [1, 1]} : vector<8x128xf32> to vector<8x8xf32>
    %c0_15 = arith.constant 0 : index
    %c0_16 = arith.constant 0 : index
    %33 = vector.load %arg6[%c0_15, %c0_16] : memref<8x8xf32, #tpu.memory_space<vmem>>, vector<8x8xf32>
    tpu.vector_store %arg6[%c0_15, %c0_16], %32 {strides = array<i32>} : memref<8x8xf32, #tpu.memory_space<vmem>>, vector<8x8xf32>,
    %c8_i32_17 = arith.constant 8 : i32
    %34 = vector.broadcast %c8_i32_17 : i32 to vector<8x128xi32>
    %35 = arith.cmpi eq, %13, %34 : vector<8x128xi32>
    %cst_18 = arith.constant 0.000000e+00 : f32
    %36 = vector.broadcast %cst_18 : f32 to vector<8x128xf32>
    %37 = arith.select %35, %12, %36 : vector<8x128xi1>, vector<8x128xf32>
    %cst_19 = arith.constant dense<0.000000e+00> : vector<8xf32>
    %38 = vector.multi_reduction <add>, %37, %cst_19 [1] : vector<8x128xf32> to vector<8xf32>
    %39 = vector.shape_cast %38 : vector<8xf32> to vector<8x1xf32>
    %c0_20 = arith.constant 0 : index
    %c0_21 = arith.constant 0 : index
    %40 = vector.load %arg7[%c0_20, %c0_21] : memref<8x1xf32, #tpu.memory_space<vmem>>, vector<8x1xf32>
    tpu.vector_store %arg7[%c0_20, %c0_21], %39 {strides = array<i32>} : memref<8x1xf32, #tpu.memory_space<vmem>>, vector<8x1xf32>,
    return
  }
  func.func @transform_0(%arg0: i32) -> (i32, i32) {
    %c0_i32 = arith.constant 0 : i32
    %c0_i32_0 = arith.constant 0 : i32
    return %arg0, %c0_i32 : i32, i32
  }
  func.func @transform_1(%arg0: i32) -> (i32, i32) {
    %c0_i32 = arith.constant 0 : i32
    %c0_i32_0 = arith.constant 0 : i32
    %c0_i32_1 = arith.constant 0 : i32
    return %c0_i32, %c0_i32_0 : i32, i32
  }
  func.func @transform_2(%arg0: i32) -> (i32, i32) {
    %c0_i32 = arith.constant 0 : i32
    %c0_i32_0 = arith.constant 0 : i32
    %c0_i32_1 = arith.constant 0 : i32
    return %c0_i32, %c0_i32_0 : i32, i32
  }
  func.func @transform_3(%arg0: i32) -> (i32, i32) {
    %c0_i32 = arith.constant 0 : i32
    %c0_i32_0 = arith.constant 0 : i32
    %c0_i32_1 = arith.constant 0 : i32
    return %c0_i32, %c0_i32_0 : i32, i32
  }
  func.func @transform_4(%arg0: i32) -> (i32, i32) {
    %c0_i32 = arith.constant 0 : i32
    %c0_i32_0 = arith.constant 0 : i32
    %c0_i32_1 = arith.constant 0 : i32
    return %c0_i32, %c0_i32_0 : i32, i32
  }
  func.func @transform_5(%arg0: i32) -> (i32, i32) {
    %c0_i32 = arith.constant 0 : i32
    %c0_i32_0 = arith.constant 0 : i32
    return %arg0, %c0_i32 : i32, i32
  }
  func.func @transform_6(%arg0: i32) -> (i32, i32) {
    %c0_i32 = arith.constant 0 : i32
    %c0_i32_0 = arith.constant 0 : i32
    return %arg0, %c0_i32 : i32, i32
  }
}

</mosaic_0001>

<llo_original>
// kernel: tpu_custom_call.1
$region0: #{tpu_custom_call.1}
  #allocation0 [shape = 'u32[]', space=smem, size = 0x4, offset = 0x4, fixed_abs, tag = 'smem constant byte address 0x4 - core index']
  #allocation1 [shape = 'u32[144,128]{1,0:T(1,128)}', space=vmem, size = 0x12000, scoped, tag = 'internal scratch']
  %s0 = inlined_call_operand.hbm [shape: f32[8,16], index: 0, kind: input, shape index: {}]
  %s1 = inlined_call_operand.hbm [shape: f32[16,64], index: 1, kind: input, shape index: {}]
  %s2 = inlined_call_operand.vmem [shape: f32[1,64], index: 2, kind: input, shape index: {}]
  %s3 = inlined_call_operand.hbm [shape: f32[64,128], index: 3, kind: input, shape index: {}]
  %s4 = inlined_call_operand.vmem [shape: f32[1,128], index: 4, kind: input, shape index: {}]
  %s5 = inlined_call_operand.hbm [shape: f32[8,8], index: 5, kind: output, shape index: {0}]
  %s6 = inlined_call_operand.vmem [shape: f32[8,1], index: 6, kind: output, shape index: {1}]
  %7 = xla_tuple %s5, %s6
  %s8 = sld [smem:[#allocation0]]
  $region50: #{tpu_custom_call.1} parent=0
    _
  %s10 = ssub.s32 1, %s8
  %s11 = scalar_select 0, %s10, %s8
  $region1: #{tpu_custom_call.1} parent=0
    #allocation2 [shape = 'u8[4096]{0}', space=vmem, size = 0x1000, scoped, tag = 'input window, operand 0, single buffered']
    #allocation3 [shape = 's32[1]{0}', space=sflag, size = 0x4, scoped, tag = 'scoped memory for tpu_custom_call.1']
    #allocation4 [shape = 's32[1]{0}', space=sflag, size = 0x4, scoped, tag = 'scoped memory for tpu_custom_call.1']
    #allocation5 [shape = 'u8[8192]{0}', space=vmem, size = 0x2000, scoped, tag = 'input window, operand 1, single buffered']
    #allocation6 [shape = 's32[1]{0}', space=sflag, size = 0x4, scoped, tag = 'scoped memory for tpu_custom_call.1']
    #allocation7 [shape = 'u8[32768]{0}', space=vmem, size = 0x8000, scoped, tag = 'input window, operand 3, single buffered']
    #allocation8 [shape = 'u8[4096]{0}', space=vmem, size = 0x1000, scoped, tag = 'output window, operand 0, single buffered']
    %12 = vsyncpa [#allocation3], 0
    %13 = vsyncpa [#allocation6], 0
    %14 = vsyncpa [#allocation4], 0
    // Predicated region
    $region2: #{tpu_custom_call.1} parent=1 // pred_check
      _
    $region3: #{tpu_custom_call.1} parent=1 // pred_check_branch
      %16 = sbr.rel (0) target = $region5
    $region4: #{tpu_custom_call.1} parent=1 // pred_region
      %s18 = ssub.s32 128, 128
      %19 = vsyncadd [#allocation3], %s18
      %s21 = sshll.u32 [#allocation2], 4
      %s22 = int_to_ptr.vmem [resolvable:$true] %s21
      %24 = dma.hbm_to_vmem [thread:$0]  %s0, 128, %s22, [#allocation3]
    $region5: #{tpu_custom_call.1} parent=1 // pred_fallthru
      _
    // Predicated region
    $region6: #{tpu_custom_call.1} parent=1 // pred_check
      _
    $region7: #{tpu_custom_call.1} parent=1 // pred_check_branch
      %26 = sbr.rel (0) target = $region9
    $region8: #{tpu_custom_call.1} parent=1 // pred_region
      %s28 = ssub.s32 256, 256
      %29 = vsyncadd [#allocation6], %s28
      %s30 = sshll.u32 [#allocation5], 4
      %s31 = int_to_ptr.vmem [resolvable:$true] %s30
      %36 = dma.hbm_to_vmem [thread:$0]  %s1, 256, %s31, [#allocation6], 128, 128, 8
    $region9: #{tpu_custom_call.1} parent=1 // pred_fallthru
      _
    // Predicated region
    $region10: #{tpu_custom_call.1} parent=1 // pred_check
      _
    $region11: #{tpu_custom_call.1} parent=1 // pred_check_branch
      %38 = sbr.rel (0) target = $region13
    $region12: #{tpu_custom_call.1} parent=1 // pred_region
      _
    $region13: #{tpu_custom_call.1} parent=1 // pred_fallthru
      _
    // Predicated region
    $region14: #{tpu_custom_call.1} parent=1 // pred_check
      _
    $region15: #{tpu_custom_call.1} parent=1 // pred_check_branch
      %40 = sbr.rel (0) target = $region17
    $region16: #{tpu_custom_call.1} parent=1 // pred_region
      %s42 = ssub.s32 1024, 1024
      %43 = vsyncadd [#allocation6], %s42
      %s44 = sshll.u32 [#allocation7], 4
      %s45 = int_to_ptr.vmem [resolvable:$true] %s44
      %50 = dma.hbm_to_vmem [thread:$0]  %s3, 1024, %s45, [#allocation6], 128, 128, 8
    $region17: #{tpu_custom_call.1} parent=1 // pred_fallthru
      _
    // Predicated region
    $region18: #{tpu_custom_call.1} parent=1 // pred_check
      _
    $region19: #{tpu_custom_call.1} parent=1 // pred_check_branch
      %52 = sbr.rel (0) target = $region21
    $region20: #{tpu_custom_call.1} parent=1 // pred_region
      _
    $region21: #{tpu_custom_call.1} parent=1 // pred_fallthru
      _
    // Predicated region
    $region22: #{tpu_custom_call.1} parent=1 // pred_check
      _
    $region23: #{tpu_custom_call.1} parent=1 // pred_check_branch
      %54 = sbr.rel (0) target = $region25
    $region24: #{tpu_custom_call.1} parent=1 // pred_region
      %55 = dma.done [#allocation3], 128
    $region25: #{tpu_custom_call.1} parent=1 // pred_fallthru
      _
    // Predicated region
    $region26: #{tpu_custom_call.1} parent=1 // pred_check
      _
    $region27: #{tpu_custom_call.1} parent=1 // pred_check_branch
      %57 = sbr.rel (0) target = $region29
    $region28: #{tpu_custom_call.1} parent=1 // pred_region
      %58 = dma.done [#allocation6], 256
    $region29: #{tpu_custom_call.1} parent=1 // pred_fallthru
      _
    // Predicated region
    $region30: #{tpu_custom_call.1} parent=1 // pred_check
      _
    $region31: #{tpu_custom_call.1} parent=1 // pred_check_branch
      %60 = sbr.rel (0) target = $region33
    $region32: #{tpu_custom_call.1} parent=1 // pred_region
      %61 = dma.done [#allocation6], 1024
    $region33: #{tpu_custom_call.1} parent=1 // pred_fallthru
      _
    %v62 = vld [vmem:[#allocation2] sm:$0xff]
    %v63 = vld [vmem:[#allocation5] sm:$0xff]
    %v64 = vld [vmem:[#allocation5 + $0x8] sm:$0xff]
    %v65 = vld [vmem:[%s2] sm:$0x1]
    %v67 = vlaneseq
    %v68 = vshrl.u32 %v67, 7
    %v69 = vsub.s32 0, %v68
    %v70 = vrot.slane %v65, %v69
    %vm72 = vcmask 130048
    %v74 = vsel %vm72, %v62, 0
    %76 = vmatprep.subr.mxu0 0.0
    %77 = vmatpush1.msra.mxu0 %v63
    %78 = vmatprep.subr.mxu0 0.0
    %79 = vmatpush1.msra.mxu0 %v64
    %80 = vmatprep.subr.mxu0 0.0
    %81 = vmatpush1.msra.mxu0 0.0
    %82 = vmatprep.subr.mxu0 0.0
    %83 = vmatpush1.msra.mxu0 0.0
    %84 = vmatprep.subr.mxu0 0.0
    %85 = vmatpush1.msra.mxu0 0.0
    %86 = vmatprep.subr.mxu0 0.0
    %87 = vmatpush1.msra.mxu0 0.0
    %88 = vmatprep.subr.mxu0 0.0
    %89 = vmatpush1.msra.mxu0 0.0
    %90 = vmatprep.subr.mxu0 0.0
    %91 = vmatpush1.msra.mxu0 0.0
    %92 = vmatprep.subr.mxu0 0.0
    %93 = vmatpush1.msra.mxu0 0.0
    %94 = vmatprep.subr.mxu0 0.0
    %95 = vmatpush1.msra.mxu0 0.0
    %96 = vmatprep.subr.mxu0 0.0
    %97 = vmatpush1.msra.mxu0 0.0
    %98 = vmatprep.subr.mxu0 0.0
    %99 = vmatpush1.msra.mxu0 0.0
    %100 = vmatprep.subr.mxu0 0.0
    %101 = vmatpush1.msra.mxu0 0.0
    %102 = vmatprep.subr.mxu0 0.0
    %103 = vmatpush1.msra.mxu0 0.0
    %104 = vmatprep.subr.mxu0 0.0
    %105 = vmatpush1.msra.mxu0 0.0
    %106 = vmatprep.subr.mxu0 0.0
    %107 = vmatpush1.msra.mxu0 0.0
    %108 = vmatprep.subr.mxu0 0.0
    %109 = vmatpush1.msra.mxu0 0.0
    %110 = vmatprep.subr.mxu0 0.0
    %111 = vmatpush1.msra.mxu0 0.0
    %112 = vmatprep.subr.mxu0 0.0
    %113 = vmatpush1.msra.mxu0 0.0
    %114 = vmatprep.subr.mxu0 0.0
    %115 = vmatpush1.msra.mxu0 0.0
    %116 = vmatprep.subr.mxu0 0.0
    %117 = vmatpush1.msra.mxu0 0.0
    %118 = vmatprep.subr.mxu0 0.0
    %119 = vmatpush1.msra.mxu0 0.0
    %120 = vmatprep.subr.mxu0 0.0
    %121 = vmatpush1.msra.mxu0 0.0
    %122 = vmatprep.subr.mxu0 0.0
    %123 = vmatpush1.msra.mxu0 0.0
    %124 = vmatprep.subr.mxu0 0.0
    %125 = vmatpush1.msra.mxu0 0.0
    %126 = vmatprep.subr.mxu0 0.0
    %127 = vmatpush1.msra.mxu0 0.0
    %128 = vmatprep.subr.mxu0 0.0
    %129 = vmatpush1.msra.mxu0 0.0
    %130 = vmatprep.subr.mxu0 0.0
    %131 = vmatpush1.msra.mxu0 0.0
    %132 = vmatprep.subr.mxu0 0.0
    %133 = vmatpush1.msra.mxu0 0.0
    %134 = vmatprep.subr.mxu0 0.0
    %135 = vmatpush1.msra.mxu0 0.0
    %136 = vmatprep.subr.mxu0 0.0
    %137 = vmatpush1.msra.mxu0 0.0
    %138 = vmatprep.subr.mxu0 0.0
    %139 = vmatpush1.msra.mxu0 0.0
    %140 = vmatprep.mubr.f32.mxu0 0.0
    %141 = vmatmul.mubr.f32.gmra.mrb[0].mxu0 %v74
    %v142 = vpop.f32.mrb[0].mxu0
    %v143 = vadd.f32 %v70, %v142
    %v144 = vpop.f32.mrb[0].mxu0
    %145 = vdwg.mxu0
    %v146 = vmax.f32 %v143, 0.0
    %v147 = vld [vmem:[#allocation7] sm:$0xff]
    %v148 = vld [vmem:[#allocation7 + $0x8] sm:$0xff]
    %v149 = vld [vmem:[#allocation7 + $0x10] sm:$0xff]
    %v150 = vld [vmem:[#allocation7 + $0x18] sm:$0xff]
    %v151 = vld [vmem:[#allocation7 + $0x20] sm:$0xff]
    %v152 = vld [vmem:[#allocation7 + $0x28] sm:$0xff]
    %v153 = vld [vmem:[#allocation7 + $0x30] sm:$0xff]
    %v154 = vld [vmem:[#allocation7 + $0x38] sm:$0xff]
    %v155 = vld [vmem:[%s4] sm:$0x1]
    %v157 = vlaneseq
    %v158 = vshrl.u32 %v157, 7
    %v159 = vsub.s32 0, %v158
    %v160 = vrot.slane %v155, %v159
    %vm162 = vcmask 523264
    %v164 = vsel %vm162, %v146, 0
    %166 = vmatprep.subr.mxu0 0.0
    %167 = vmatpush1.msra.mxu0 %v147
    %168 = vmatprep.subr.mxu0 0.0
    %169 = vmatpush1.msra.mxu0 %v148
    %170 = vmatprep.subr.mxu0 0.0
    %171 = vmatpush1.msra.mxu0 %v149
    %172 = vmatprep.subr.mxu0 0.0
    %173 = vmatpush1.msra.mxu0 %v150
    %174 = vmatprep.subr.mxu0 0.0
    %175 = vmatpush1.msra.mxu0 %v151
    %176 = vmatprep.subr.mxu0 0.0
    %177 = vmatpush1.msra.mxu0 %v152
    %178 = vmatprep.subr.mxu0 0.0
    %179 = vmatpush1.msra.mxu0 %v153
    %180 = vmatprep.subr.mxu0 0.0
    %181 = vmatpush1.msra.mxu0 %v154
    %182 = vmatprep.subr.mxu0 0.0
    %183 = vmatpush1.msra.mxu0 0.0
    %184 = vmatprep.subr.mxu0 0.0
    %185 = vmatpush1.msra.mxu0 0.0
    %186 = vmatprep.subr.mxu0 0.0
    %187 = vmatpush1.msra.mxu0 0.0
    %188 = vmatprep.subr.mxu0 0.0
    %189 = vmatpush1.msra.mxu0 0.0
    %190 = vmatprep.subr.mxu0 0.0
    %191 = vmatpush1.msra.mxu0 0.0
    %192 = vmatprep.subr.mxu0 0.0
    %193 = vmatpush1.msra.mxu0 0.0
    %194 = vmatprep.subr.mxu0 0.0
    %195 = vmatpush1.msra.mxu0 0.0
    %196 = vmatprep.subr.mxu0 0.0
    %197 = vmatpush1.msra.mxu0 0.0
    %198 = vmatprep.subr.mxu0 0.0
    %199 = vmatpush1.msra.mxu0 0.0
    %200 = vmatprep.subr.mxu0 0.0
    %201 = vmatpush1.msra.mxu0 0.0
    %202 = vmatprep.subr.mxu0 0.0
    %203 = vmatpush1.msra.mxu0 0.0
    %204 = vmatprep.subr.mxu0 0.0
    %205 = vmatpush1.msra.mxu0 0.0
    %206 = vmatprep.subr.mxu0 0.0
    %207 = vmatpush1.msra.mxu0 0.0
    %208 = vmatprep.subr.mxu0 0.0
    %209 = vmatpush1.msra.mxu0 0.0
    %210 = vmatprep.subr.mxu0 0.0
    %211 = vmatpush1.msra.mxu0 0.0
    %212 = vmatprep.subr.mxu0 0.0
    %213 = vmatpush1.msra.mxu0 0.0
    %214 = vmatprep.subr.mxu0 0.0
    %215 = vmatpush1.msra.mxu0 0.0
    %216 = vmatprep.subr.mxu0 0.0
    %217 = vmatpush1.msra.mxu0 0.0
    %218 = vmatprep.subr.mxu0 0.0
    %219 = vmatpush1.msra.mxu0 0.0
    %220 = vmatprep.subr.mxu0 0.0
    %221 = vmatpush1.msra.mxu0 0.0
    %222 = vmatprep.subr.mxu0 0.0
    %223 = vmatpush1.msra.mxu0 0.0
    %224 = vmatprep.subr.mxu0 0.0
    %225 = vmatpush1.msra.mxu0 0.0
    %226 = vmatprep.subr.mxu0 0.0
    %227 = vmatpush1.msra.mxu0 0.0
    %228 = vmatprep.subr.mxu0 0.0
    %229 = vmatpush1.msra.mxu0 0.0
    %230 = vmatprep.mubr.f32.mxu0 0.0
    %231 = vmatmul.mubr.f32.gmra.mrb[0].mxu0 %v164
    %v232 = vpop.f32.mrb[0].mxu0
    %v233 = vadd.f32 %v160, %v232
    %v234 = vpop.f32.mrb[0].mxu0
    %235 = vdwg.mxu0
    %v236 = vlaneseq
    %v237 = vand.u32 %v236, 127
    %vm238 = vcmp.lt.s32.totalorder %v237, 8
    %v239 = vsel %vm238, %v233, -1e+30
    %240 = vmax.xlane.f32.xlu0 %v239
    %v241 = vpop.xlane.xlu0 %240
    %v242 = vsub.f32 %v239, %v241
    %v243 = vmul.f32 %v242, 1.442695
    %v244 = vpow.pop %v243
    %245 = vadd.xlane.f32.xlu0 %v244
    %v246 = vpop.xlane.xlu0 %245
    %v247 = vrcp.pop %v246
    %v248 = vmul.f32 %v246, %v247
    %v249 = vsub.f32 2.0, %v248
    %v250 = vmul.f32 %v247, %v249
    %v251 = vmul.f32 %v244, %v250
    %vm252 = vcmask 64512
    %253 = vst.msk [vmem:[#allocation8] sm:$0xff] %vm252, %v251
    %vm254 = vcmp.eq.s32.totalorder %v237, 8
    %v255 = vsel %vm254, %v233, 0.0
    %256 = vadd.xlane.f32.xlu0 %v255
    %v257 = vpop.xlane.xlu0 %256
    %vm258 = vcmask 7168
    %259 = vst.msk [vmem:[%s6] sm:$0xff] %vm258, %v257
    // Predicated region
    $region34: #{tpu_custom_call.1} parent=1 // pred_check
      _
    $region35: #{tpu_custom_call.1} parent=1 // pred_check_branch
      %261 = sbr.rel (0) target = $region37
    $region36: #{tpu_custom_call.1} parent=1 // pred_region
      %s263 = ssub.s32 128, 128
      %264 = vsyncadd [#allocation4], %s263
      %s266 = sshll.u32 [#allocation8], 4
      %s267 = int_to_ptr.vmem [resolvable:$true] %s266
      %269 = dma.vmem_to_hbm [thread:$0]  %s267, 128, %s5, [#allocation4]
    $region37: #{tpu_custom_call.1} parent=1 // pred_fallthru
      _
    // Predicated region
    $region38: #{tpu_custom_call.1} parent=1 // pred_check
      _
    $region39: #{tpu_custom_call.1} parent=1 // pred_check_branch
      %271 = sbr.rel (0) target = $region41
    $region40: #{tpu_custom_call.1} parent=1 // pred_region
      _
    $region41: #{tpu_custom_call.1} parent=1 // pred_fallthru
      _
    // Predicated region
    $region42: #{tpu_custom_call.1} parent=1 // pred_check
      _
    $region43: #{tpu_custom_call.1} parent=1 // pred_check_branch
      %273 = sbr.rel (0) target = $region45
    $region44: #{tpu_custom_call.1} parent=1 // pred_region
      %274 = dma.done [#allocation4], 128
    $region45: #{tpu_custom_call.1} parent=1 // pred_fallthru
      _
    // Predicated region
    $region46: #{tpu_custom_call.1} parent=1 // pred_check
      _
    $region47: #{tpu_custom_call.1} parent=1 // pred_check_branch
      %276 = sbr.rel (0) target = $region49
    $region48: #{tpu_custom_call.1} parent=1 // pred_region
      _
    $region49: #{tpu_custom_call.1} parent=1 // pred_fallthru
      _
    %277 = vsyncpa [#allocation3], 1
    %278 = vsyncpa [#allocation6], 1
    %279 = vsyncpa [#allocation4], 1

</llo_original>
